<compile_context>
chip_gen: v7x
topology: tpu7x:2x2x1
jax: 0.10.0
libtpu: 0.0.40
codegen_flags: <defaults>
</compile_context>

<pallas_src>
import jax
import jax.numpy as jnp
from jax import lax
from jax.experimental import pallas as pl
from jax.experimental.pallas import tpu as pltpu


def _round_up(a, m):
    return (a + m - 1) // m * m


def cnn_seq_encoder_kernel(x_ref, w1a_ref, w1b_ref, b1_ref, w2_ref, b2_ref,
                           out_ref):
    tb, inner = out_ref.shape
    n, _ = x_ref.shape
    L = n // tb

    # In-kernel bf16 cast (x arrives in its original f32 straight from HBM).
    x = x_ref[...].astype(jnp.bfloat16)                      # (tb*L, C)

    # Row-shifted view: row r -> x row r+1 (wrapping inside the block).  The
    # wrapped / cross-batch rows only affect each batch element's t = L-1
    # slot, which is masked out of the time-sum below.
    x_next = jnp.concatenate([x[1:, :], x[:1, :]], axis=0)   # (tb*L, C)

    # Conv1d #1 as two K=C matmuls (no lane-concat of a tiny-C operand).
    p0 = jnp.dot(x, w1a_ref[...], preferred_element_type=jnp.float32)
    p1 = jnp.dot(x_next, w1b_ref[...], preferred_element_type=jnp.float32)
    h = jnp.maximum(p0 + p1 + b1_ref[...], 0.0)              # (tb*L, I) f32

    # (tb*L, I) -> (tb, L, I); layout-preserving when L % 8 == 0.
    h3 = h.reshape(tb, L, inner)

    # Per-batch time means via one masked time-sum + endpoint corrections:
    #   S  = sum_{t=0..L-2} h[t]        (t = L-1 is the invalid shifted row;
    #                                    `where` keeps this NaN-safe even for
    #                                    ragged boundary blocks)
    #   m0 = (S - h[L-2]) / (L-2) = mean_{t in [0, L-3]} h[t]
    #   m1 = (S - h[0])   / (L-2) = mean_{t in [1, L-2]} h[t]
    t_ids = lax.broadcasted_iota(jnp.int32, (1, L, 1), 1)
    s = jnp.sum(jnp.where(t_ids < L - 1, h3, 0.0), axis=1)   # (tb, I) f32
    inv = 1.0 / (L - 2)
    m0 = (s - h3[:, L - 2, :]) * inv
    m1 = (s - h3[:, 0, :]) * inv

    # Conv1d #2 + time-mean, hoisted through linearity and tap-fused along K.
    # Kept in f32: the matmul is tiny and this avoids extra bf16 rounding
    # relative to the PyTorch f32 path (review correctness note).
    scat = jnp.concatenate([m0, m1], axis=-1)                # (tb, 2I) f32
    y = jnp.dot(scat, w2_ref[...],
                preferred_element_type=jnp.float32) + b2_ref[...]
    out_ref[...] = y.astype(out_ref.dtype)


def cnn_seq_encoder(x, w1, b1, w2, b2, *,
                    vmem_data_budget_bytes=24 * 1024 * 1024,
                    vmem_limit_bytes=40 * 1024 * 1024):
    """x: (B, L, C_in) f32 (the PyTorch input BEFORE its .permute(0,2,1)).
    w1: (inner, C_in, 2), b1: (inner,)  -- PyTorch Conv1d weight/bias layout.
    w2: (inner, inner, 2), b2: (inner,)
    Returns (B, inner), matching torch.mean(cnn2(relu(cnn1(x^T))), axis=2)."""
    B, L, C = x.shape
    inner = w1.shape[0]
    assert L >= 3, "CNNSeqEncoder needs L >= 3 (two k=2 convs + non-empty mean)"

    # ---- batch-tile selection (explicit cross-generation VMEM budget) ----
    # Per-batch-element VMEM bytes in one grid step:
    #   f32 x block (double-buffered) + in-kernel bf16 x / x_next copies
    #   + f32 conv1 intermediates (p0/p1/h + sum temp) + f32 out block.
    per_b = (2 * L * C * 4
             + 2 * L * C * 2
             + 3 * L * inner * 4
             + 2 * inner * 4)
    cap = max(8, (vmem_data_budget_bytes // per_b) // 8 * 8)

    tb = min(cap, _round_up(B, 8))
    if B >= 64:
        # Keep >= 2 grid steps so dimension_semantics=("parallel",) can shard
        # across v7x's two TensorCores (steps remain fat at this batch size).
        tb = min(tb, _round_up(pl.cdiv(B, 2), 8))
    n_steps = pl.cdiv(B, tb)
    if n_steps == 1:
        tb = B    # exact-fit block (== full array dims): no pad, no ragged edge

    # x stays f32; flattening (B, L, C) -> (B*L, C) is free for a contiguous
    # array.  No wrapper-side zero-pad: a ragged last block is read with
    # unspecified padding (only reachable through the masked t = L-1 slot or
    # discarded output rows) and its out-of-bounds output rows are masked.
    x_flat = x.reshape(B * L, C)

    # Conv weights, (in, out)-oriented.  Conv1: one bf16 array per tap (two
    # K=C matmuls in the kernel).  Conv2: tap-fused along K, kept in f32.
    w1a = jnp.transpose(w1[:, :, 0]).astype(jnp.bfloat16)          # (C, I)
    w1b = jnp.transpose(w1[:, :, 1]).astype(jnp.bfloat16)          # (C, I)
    b1r = b1.reshape(1, inner).astype(jnp.float32)
    w2cat = jnp.concatenate(
        [jnp.transpose(w2[:, :, 0]), jnp.transpose(w2[:, :, 1])],
        axis=0).astype(jnp.float32)                                # (2I, I)
    b2r = b2.reshape(1, inner).astype(jnp.float32)

    # Constant-index operands are fetched once; single-buffer them.
    const = dict(pipeline_mode=pl.Buffered(1))

    out = pl.pallas_call(
        cnn_seq_encoder_kernel,
        out_shape=jax.ShapeDtypeStruct((B, inner), jnp.float32),
        grid_spec=pltpu.PrefetchScalarGridSpec(
            num_scalar_prefetch=0,
            grid=(n_steps,),
            in_specs=[
                pl.BlockSpec((tb * L, C), lambda i: (i, 0)),
                pl.BlockSpec((C, inner), lambda i: (0, 0), **const),
                pl.BlockSpec((C, inner), lambda i: (0, 0), **const),
                pl.BlockSpec((1, inner), lambda i: (0, 0), **const),
                pl.BlockSpec((2 * inner, inner), lambda i: (0, 0), **const),
                pl.BlockSpec((1, inner), lambda i: (0, 0), **const),
            ],
            out_specs=pl.BlockSpec((tb, inner), lambda i: (i, 0)),
        ),
        compiler_params=pltpu.CompilerParams(
            dimension_semantics=("parallel",),
            vmem_limit_bytes=vmem_limit_bytes),
    )(x_flat, w1a, w1b, b1r, w2cat, b2r)
    return out


def reference(x, w1, b1, w2, b2):
    """Pure-JAX f32 reference mirroring the PyTorch forward."""
    h = (jnp.einsum("blc,dc->bld", x[:, :-1, :], w1[:, :, 0])
         + jnp.einsum("blc,dc->bld", x[:, 1:, :], w1[:, :, 1]) + b1)
    h = jnp.maximum(h, 0.0)
    y = (jnp.einsum("blc,dc->bld", h[:, :-1, :], w2[:, :, 0])
         + jnp.einsum("blc,dc->bld", h[:, 1:, :], w2[:, :, 1]) + b2)
    return jnp.mean(y, axis=1)


if __name__ == "__main__":
    B, L, C_IN, INNER = 2, 16, 4, 32

    key = jax.random.PRNGKey(0)
    kx, kw1, kb1, kw2, kb2 = jax.random.split(key, 5)

    x = jax.random.normal(kx, (B, L, C_IN), dtype=jnp.float32)

    # Deterministic parameter init (Conv1d-style uniform bounds).
    bound1 = 1.0 / (C_IN * 2) ** 0.5
    w1 = jax.random.uniform(kw1, (INNER, C_IN, 2), jnp.float32, -bound1, bound1)
    b1 = jax.random.uniform(kb1, (INNER,), jnp.float32, -bound1, bound1)
    bound2 = 1.0 / (INNER * 2) ** 0.5
    w2 = jax.random.uniform(kw2, (INNER, INNER, 2), jnp.float32, -bound2, bound2)
    b2 = jax.random.uniform(kb2, (INNER,), jnp.float32, -bound2, bound2)

    out = jax.block_until_ready(cnn_seq_encoder(x, w1, b1, w2, b2))

    ref = reference(x, w1, b1, w2, b2)
    assert out.shape == (B, INNER), out.shape
    max_err = jnp.max(jnp.abs(out - ref))
    # bf16 conv1 operands with f32 accumulation (conv2 fully f32) vs f32 ref.
    assert jnp.allclose(out, ref, atol=1e-2, rtol=1e-2), (
        f"mismatch vs reference (max abs err {max_err})")

    print("KERNEL_OK")
</pallas_src>

<mosaic_0001>
module attributes {stable_mosaic.version = 11 : i64} {
  func.func @cnn_seq_encoder_kernel(%arg0: i32, %arg1: memref<32x4xf32, #tpu.memory_space<vmem>>, %arg2: memref<4x32xbf16, #tpu.memory_space<vmem>>, %arg3: memref<4x32xbf16, #tpu.memory_space<vmem>>, %arg4: memref<1x32xf32, #tpu.memory_space<vmem>>, %arg5: memref<64x32xf32, #tpu.memory_space<vmem>>, %arg6: memref<1x32xf32, #tpu.memory_space<vmem>>, %arg7: memref<2x32xf32, #tpu.memory_space<vmem>>) attributes {dimension_semantics = [#tpu.dimension_semantics<parallel>], iteration_bounds = array<i64: 1>, scalar_prefetch = 0 : i64, scratch_operands = 0 : i64, tpu.core_type = #tpu.core_type<tc>, window_params = [{transform_indices = @transform_0, window_bounds = array<i64: 32, 4>}, {pipeline_mode = #tpu.pipeline_mode<synchronous>, transform_indices = @transform_1, window_bounds = array<i64: 4, 32>}, {pipeline_mode = #tpu.pipeline_mode<synchronous>, transform_indices = @transform_2, window_bounds = array<i64: 4, 32>}, {pipeline_mode = #tpu.pipeline_mode<synchronous>, transform_indices = @transform_3, window_bounds = array<i64: 1, 32>}, {pipeline_mode = #tpu.pipeline_mode<synchronous>, transform_indices = @transform_4, window_bounds = array<i64: 64, 32>}, {pipeline_mode = #tpu.pipeline_mode<synchronous>, transform_indices = @transform_5, window_bounds = array<i64: 1, 32>}, {transform_indices = @transform_6, window_bounds = array<i64: 2, 32>}]} {
    %c0 = arith.constant 0 : index
    %c0_0 = arith.constant 0 : index
    %0 = vector.load %arg1[%c0, %c0_0] : memref<32x4xf32, #tpu.memory_space<vmem>>, vector<32x4xf32>
    %1 = arith.truncf %0 : vector<32x4xf32> to vector<32x4xbf16>
    %2 = vector.extract_strided_slice %1 {offsets = [1, 0], sizes = [31, 4], strides = [1, 1]} : vector<32x4xbf16> to vector<31x4xbf16>
    %3 = vector.extract_strided_slice %1 {offsets = [0, 0], sizes = [1, 4], strides = [1, 1]} : vector<32x4xbf16> to vector<1x4xbf16>
    %4 = tpu.concatenate %2, %3 in 0 : vector<31x4xbf16>, vector<1x4xbf16> -> vector<32x4xbf16>
    %c0_1 = arith.constant 0 : index
    %c0_2 = arith.constant 0 : index
    %5 = vector.load %arg2[%c0_1, %c0_2] : memref<4x32xbf16, #tpu.memory_space<vmem>>, vector<4x32xbf16>
    %cst = arith.constant dense<0.000000e+00> : vector<32x32xf32>
    %6 = tpu.matmul %1, %5, %cst {dimension_numbers = #tpu.dot_dimension_numbers<[1], [0], [0], [1], [0, 0, 1, 1], [], []>} : vector<32x4xbf16>, vector<4x32xbf16>, vector<32x32xf32> -> vector<32x32xf32>
    %c0_3 = arith.constant 0 : index
    %c0_4 = arith.constant 0 : index
    %7 = vector.load %arg3[%c0_3, %c0_4] : memref<4x32xbf16, #tpu.memory_space<vmem>>, vector<4x32xbf16>
    %cst_5 = arith.constant dense<0.000000e+00> : vector<32x32xf32>
    %8 = tpu.matmul %4, %7, %cst_5 {dimension_numbers = #tpu.dot_dimension_numbers<[1], [0], [0], [1], [0, 0, 1, 1], [], []>} : vector<32x4xbf16>, vector<4x32xbf16>, vector<32x32xf32> -> vector<32x32xf32>
    %9 = arith.addf %6, %8 : vector<32x32xf32>
    %c0_6 = arith.constant 0 : index
    %c0_7 = arith.constant 0 : index
    %10 = vector.load %arg4[%c0_6, %c0_7] : memref<1x32xf32, #tpu.memory_space<vmem>>, vector<1x32xf32>
    %11 = vector.broadcast %10 : vector<1x32xf32> to vector<32x32xf32>
    %12 = arith.addf %9, %11 : vector<32x32xf32>
    %cst_8 = arith.constant 0.000000e+00 : f32
    %13 = vector.broadcast %cst_8 : f32 to vector<32x32xf32>
    %14 = arith.maximumf %12, %13 : vector<32x32xf32>
    %15 = vector.shape_cast %14 : vector<32x32xf32> to vector<2x16x32xf32>
    %16 = tpu.iota {dimensions = array<i32: 1>} : vector<1x16x1xi32>
    %c15_i32 = arith.constant 15 : i32
    %17 = vector.broadcast %c15_i32 : i32 to vector<1x16x1xi32>
    %18 = arith.cmpi slt, %16, %17 : vector<1x16x1xi32>
    %cst_9 = arith.constant 0.000000e+00 : f32
    %19 = vector.shape_cast %18 : vector<1x16x1xi1> to vector<1x16x1xi1>
    %20 = vector.broadcast %19 : vector<1x16x1xi1> to vector<2x16x32xi1>
    %21 = vector.broadcast %cst_9 : f32 to vector<2x16x32xf32>
    %22 = arith.select %20, %15, %21 : vector<2x16x32xi1>, vector<2x16x32xf32>
    %cst_10 = arith.constant dense<0.000000e+00> : vector<2x32xf32>
    %23 = vector.multi_reduction <add>, %22, %cst_10 [1] : vector<2x16x32xf32> to vector<2x32xf32>
    %24 = vector.extract_strided_slice %15 {offsets = [0, 14, 0], sizes = [2, 1, 32], strides = [1, 1, 1]} : vector<2x16x32xf32> to vector<2x1x32xf32>
    %25 = vector.shape_cast %24 : vector<2x1x32xf32> to vector<2x32xf32>
    %26 = arith.subf %23, %25 : vector<2x32xf32>
    %cst_11 = arith.constant 0.0714285746 : f32
    %27 = vector.broadcast %cst_11 : f32 to vector<2x32xf32>
    %28 = arith.mulf %26, %27 : vector<2x32xf32>
    %29 = vector.extract_strided_slice %15 {offsets = [0, 0, 0], sizes = [2, 1, 32], strides = [1, 1, 1]} : vector<2x16x32xf32> to vector<2x1x32xf32>
    %30 = vector.shape_cast %29 : vector<2x1x32xf32> to vector<2x32xf32>
    %31 = arith.subf %23, %30 : vector<2x32xf32>
    %cst_12 = arith.constant 0.0714285746 : f32
    %32 = vector.broadcast %cst_12 : f32 to vector<2x32xf32>
    %33 = arith.mulf %31, %32 : vector<2x32xf32>
    %34 = tpu.concatenate %28, %33 in 1 : vector<2x32xf32>, vector<2x32xf32> -> vector<2x64xf32>
    %c0_13 = arith.constant 0 : index
    %c0_14 = arith.constant 0 : index
    %35 = vector.load %arg5[%c0_13, %c0_14] : memref<64x32xf32, #tpu.memory_space<vmem>>, vector<64x32xf32>
    %cst_15 = arith.constant dense<0.000000e+00> : vector<2x32xf32>
    %36 = tpu.matmul %34, %35, %cst_15 {dimension_numbers = #tpu.dot_dimension_numbers<[1], [0], [0], [1], [0, 0, 1, 1], [], []>} : vector<2x64xf32>, vector<64x32xf32>, vector<2x32xf32> -> vector<2x32xf32>
    %c0_16 = arith.constant 0 : index
    %c0_17 = arith.constant 0 : index
    %37 = vector.load %arg6[%c0_16, %c0_17] : memref<1x32xf32, #tpu.memory_space<vmem>>, vector<1x32xf32>
    %38 = vector.broadcast %37 : vector<1x32xf32> to vector<2x32xf32>
    %39 = arith.addf %36, %38 : vector<2x32xf32>
    %c0_18 = arith.constant 0 : index
    %c0_19 = arith.constant 0 : index
    %40 = vector.load %arg7[%c0_18, %c0_19] : memref<2x32xf32, #tpu.memory_space<vmem>>, vector<2x32xf32>
    tpu.vector_store %arg7[%c0_18, %c0_19], %39 {strides = array<i32>} : memref<2x32xf32, #tpu.memory_space<vmem>>, vector<2x32xf32>,
    return
  }
  func.func @transform_0(%arg0: i32) -> (i32, i32) {
    %c0_i32 = arith.constant 0 : i32
    %c0_i32_0 = arith.constant 0 : i32
    return %arg0, %c0_i32 : i32, i32
  }
  func.func @transform_1(%arg0: i32) -> (i32, i32) {
    %c0_i32 = arith.constant 0 : i32
    %c0_i32_0 = arith.constant 0 : i32
    %c0_i32_1 = arith.constant 0 : i32
    return %c0_i32, %c0_i32_0 : i32, i32
  }
  func.func @transform_2(%arg0: i32) -> (i32, i32) {
    %c0_i32 = arith.constant 0 : i32
    %c0_i32_0 = arith.constant 0 : i32
    %c0_i32_1 = arith.constant 0 : i32
    return %c0_i32, %c0_i32_0 : i32, i32
  }
  func.func @transform_3(%arg0: i32) -> (i32, i32) {
    %c0_i32 = arith.constant 0 : i32
    %c0_i32_0 = arith.constant 0 : i32
    %c0_i32_1 = arith.constant 0 : i32
    return %c0_i32, %c0_i32_0 : i32, i32
  }
  func.func @transform_4(%arg0: i32) -> (i32, i32) {
    %c0_i32 = arith.constant 0 : i32
    %c0_i32_0 = arith.constant 0 : i32
    %c0_i32_1 = arith.constant 0 : i32
    return %c0_i32, %c0_i32_0 : i32, i32
  }
  func.func @transform_5(%arg0: i32) -> (i32, i32) {
    %c0_i32 = arith.constant 0 : i32
    %c0_i32_0 = arith.constant 0 : i32
    %c0_i32_1 = arith.constant 0 : i32
    return %c0_i32, %c0_i32_0 : i32, i32
  }
  func.func @transform_6(%arg0: i32) -> (i32, i32) {
    %c0_i32 = arith.constant 0 : i32
    %c0_i32_0 = arith.constant 0 : i32
    return %arg0, %c0_i32 : i32, i32
  }
}

</mosaic_0001>

<llo_original>
// kernel: tpu_custom_call.1
$region0: #{tpu_custom_call.1}
  #allocation0 [shape = 'u32[]', space=smem, size = 0x4, offset = 0x4, fixed_abs, tag = 'smem constant byte address 0x4 - core index']
  #allocation1 [shape = 'u32[144,128]{1,0:T(1,128)}', space=vmem, size = 0x12000, scoped, tag = 'internal scratch']
  %s0 = inlined_call_operand.vmem [shape: f32[32,4], index: 0, kind: input, shape index: {}]
  %s1 = inlined_call_operand.vmem [shape: bf16[4,32], index: 1, kind: input, shape index: {}]
  %s2 = inlined_call_operand.vmem [shape: bf16[4,32], index: 2, kind: input, shape index: {}]
  %s3 = inlined_call_operand.vmem [shape: f32[1,32], index: 3, kind: input, shape index: {}]
  %s4 = inlined_call_operand.vmem [shape: f32[64,32], index: 4, kind: input, shape index: {}]
  %s5 = inlined_call_operand.vmem [shape: f32[1,32], index: 5, kind: input, shape index: {}]
  %s6 = inlined_call_operand.hbm [shape: f32[2,32], index: 6, kind: output, shape index: {}]
  %s7 = sld [smem:[#allocation0]]
  $region34: #{tpu_custom_call.1} parent=0
    _
  %s9 = ssub.s32 1, %s7
  %s10 = scalar_select 0, %s9, %s7
  $region1: #{tpu_custom_call.1} parent=0
    #allocation2 [shape = 'u8[1024]{0}', space=vmem, size = 0x400, scoped, tag = 'output window, operand 0, single buffered']
    #allocation3 [shape = 's32[1]{0}', space=sflag, size = 0x4, scoped, tag = 'scoped memory for tpu_custom_call.1']
    %11 = vsyncpa [#allocation3], 0
    // Predicated region
    $region2: #{tpu_custom_call.1} parent=1 // pred_check
      _
    $region3: #{tpu_custom_call.1} parent=1 // pred_check_branch
      %13 = sbr.rel (0) target = $region5
    $region4: #{tpu_custom_call.1} parent=1 // pred_region
      _
    $region5: #{tpu_custom_call.1} parent=1 // pred_fallthru
      _
    // Predicated region
    $region6: #{tpu_custom_call.1} parent=1 // pred_check
      _
    $region7: #{tpu_custom_call.1} parent=1 // pred_check_branch
      %15 = sbr.rel (0) target = $region9
    $region8: #{tpu_custom_call.1} parent=1 // pred_region
      _
    $region9: #{tpu_custom_call.1} parent=1 // pred_fallthru
      _
    // Predicated region
    $region10: #{tpu_custom_call.1} parent=1 // pred_check
      _
    $region11: #{tpu_custom_call.1} parent=1 // pred_check_branch
      %17 = sbr.rel (0) target = $region13
    $region12: #{tpu_custom_call.1} parent=1 // pred_region
      _
    $region13: #{tpu_custom_call.1} parent=1 // pred_fallthru
      _
    // Predicated region
    $region14: #{tpu_custom_call.1} parent=1 // pred_check
      _
    $region15: #{tpu_custom_call.1} parent=1 // pred_check_branch
      %19 = sbr.rel (0) target = $region17
    $region16: #{tpu_custom_call.1} parent=1 // pred_region
      _
    $region17: #{tpu_custom_call.1} parent=1 // pred_fallthru
      _
    // Predicated region
    $region18: #{tpu_custom_call.1} parent=1 // pred_check
      _
    $region19: #{tpu_custom_call.1} parent=1 // pred_check_branch
      %21 = sbr.rel (0) target = $region21
    $region20: #{tpu_custom_call.1} parent=1 // pred_region
      _
    $region21: #{tpu_custom_call.1} parent=1 // pred_fallthru
      _
    // Predicated region
    $region22: #{tpu_custom_call.1} parent=1 // pred_check
      _
    $region23: #{tpu_custom_call.1} parent=1 // pred_check_branch
      %23 = sbr.rel (0) target = $region25
    $region24: #{tpu_custom_call.1} parent=1 // pred_region
      _
    $region25: #{tpu_custom_call.1} parent=1 // pred_fallthru
      _
    %v25 = vld [vmem:[%s0] sm:$0xff]
    %v26 = vld [vmem:[%s0 + $0x8] sm:$0xff]
    %v27 = vld [vmem:[%s0 + $0x10] sm:$0xff]
    %v28 = vld [vmem:[%s0 + $0x18] sm:$0xff]
    %v29 = vpack.c.bf16 %v26, %v25
    %v30 = vpack.c.bf16 %v28, %v27
    %vm31 = vsmask.f32 7424
    %v33 = vshrl.u32 %v29, 16
    %v35 = vshll.u32 %v29, 16
    %v37 = vrot.slane %v35, 1
    %v38 = vor.u32 %v33, %v37
    %v40 = vshll.u32 %v30, 16
    %v42 = vrot.slane %v40, 1
    %v43 = vsel %vm31, %v38, %v42
    %v44 = vshrl.u32 %v30, 16
    %v46 = vor.u32 %v44, %v42
    %vm49 = vcmask 1047552
    %vm50 = vmand %vm49, %vm31
    %v51 = vsel %vm50, %v46, %v37
    %v52 = vld [vmem:[%s1] sm:$0x3]
    %v53 = vld [vmem:[%s2] sm:$0x3]
    %vm54 = vcmask 31744
    %v56 = vsel %vm54, %v43, 0
    %v59 = vsel %vm54, %v51, 0
    %vm61 = vcmask 1041408
    %v63 = vsel %vm61, %v53, 0
    %65 = vmatprep.subr.bf16.mxu0 0
    %66 = vmatpush1.bf16.msra.mxu0 %v63
    %67 = vmatprep.subr.bf16.mxu0 0
    %68 = vmatpush1.bf16.msra.mxu0 0
    %69 = vmatprep.subr.bf16.mxu0 0
    %70 = vmatpush1.bf16.msra.mxu0 0
    %71 = vmatprep.subr.bf16.mxu0 0
    %72 = vmatpush1.bf16.msra.mxu0 0
    %73 = vmatprep.subr.bf16.mxu0 0
    %74 = vmatpush1.bf16.msra.mxu0 0
    %75 = vmatprep.subr.bf16.mxu0 0
    %76 = vmatpush1.bf16.msra.mxu0 0
    %77 = vmatprep.subr.bf16.mxu0 0
    %78 = vmatpush1.bf16.msra.mxu0 0
    %79 = vmatprep.subr.bf16.mxu0 0
    %80 = vmatpush1.bf16.msra.mxu0 0
    %81 = vmatprep.subr.bf16.mxu0 0
    %82 = vmatpush1.bf16.msra.mxu0 0
    %83 = vmatprep.subr.bf16.mxu0 0
    %84 = vmatpush1.bf16.msra.mxu0 0
    %85 = vmatprep.subr.bf16.mxu0 0
    %86 = vmatpush1.bf16.msra.mxu0 0
    %87 = vmatprep.subr.bf16.mxu0 0
    %88 = vmatpush1.bf16.msra.mxu0 0
    %89 = vmatprep.subr.bf16.mxu0 0
    %90 = vmatpush1.bf16.msra.mxu0 0
    %91 = vmatprep.subr.bf16.mxu0 0
    %92 = vmatpush1.bf16.msra.mxu0 0
    %93 = vmatprep.subr.bf16.mxu0 0
    %94 = vmatpush1.bf16.msra.mxu0 0
    %95 = vmatprep.subr.bf16.mxu0 0
    %96 = vmatpush1.bf16.msra.mxu0 0
    %97 = vmatprep.mubr.bf16.mxu0 0
    %98 = vmatmul.mubr.bf16.gmra.mrb[0].mxu0 %v56
    %v99 = vpop.f32.mrb[0].mxu0
    %v100 = vadd.f32 0.0, %v99
    %v101 = vpop.f32.mrb[0].mxu0
    %v102 = vpop.f32.mrb[0].mxu0
    %v103 = vadd.f32 0.0, %v102
    %v104 = vpop.f32.mrb[0].mxu0
    %105 = vmatprep.mubr.bf16.mxu0 0
    %106 = vmatmul.mubr.bf16.gmra.mrb[0].mxu0 %v59
    %v107 = vpop.f32.mrb[0].mxu0
    %v108 = vadd.f32 0.0, %v107
    %v109 = vpop.f32.mrb[0].mxu0
    %v110 = vpop.f32.mrb[0].mxu0
    %v111 = vadd.f32 0.0, %v110
    %v112 = vpop.f32.mrb[0].mxu0
    %113 = vdwg.mxu0
    %v114 = vsel %vm54, %v29, 0
    %v116 = vsel %vm54, %v30, 0
    %v119 = vsel %vm61, %v52, 0
    %121 = vmatprep.subr.bf16.mxu0 0
    %122 = vmatpush1.bf16.msra.mxu0 %v119
    %123 = vmatprep.subr.bf16.mxu0 0
    %124 = vmatpush1.bf16.msra.mxu0 0
    %125 = vmatprep.subr.bf16.mxu0 0
    %126 = vmatpush1.bf16.msra.mxu0 0
    %127 = vmatprep.subr.bf16.mxu0 0
    %128 = vmatpush1.bf16.msra.mxu0 0
    %129 = vmatprep.subr.bf16.mxu0 0
    %130 = vmatpush1.bf16.msra.mxu0 0
    %131 = vmatprep.subr.bf16.mxu0 0
    %132 = vmatpush1.bf16.msra.mxu0 0
    %133 = vmatprep.subr.bf16.mxu0 0
    %134 = vmatpush1.bf16.msra.mxu0 0
    %135 = vmatprep.subr.bf16.mxu0 0
    %136 = vmatpush1.bf16.msra.mxu0 0
    %137 = vmatprep.subr.bf16.mxu0 0
    %138 = vmatpush1.bf16.msra.mxu0 0
    %139 = vmatprep.subr.bf16.mxu0 0
    %140 = vmatpush1.bf16.msra.mxu0 0
    %141 = vmatprep.subr.bf16.mxu0 0
    %142 = vmatpush1.bf16.msra.mxu0 0
    %143 = vmatprep.subr.bf16.mxu0 0
    %144 = vmatpush1.bf16.msra.mxu0 0
    %145 = vmatprep.subr.bf16.mxu0 0
    %146 = vmatpush1.bf16.msra.mxu0 0
    %147 = vmatprep.subr.bf16.mxu0 0
    %148 = vmatpush1.bf16.msra.mxu0 0
    %149 = vmatprep.subr.bf16.mxu0 0
    %150 = vmatpush1.bf16.msra.mxu0 0
    %151 = vmatprep.subr.bf16.mxu0 0
    %152 = vmatpush1.bf16.msra.mxu0 0
    %153 = vmatprep.mubr.bf16.mxu0 0
    %154 = vmatmul.mubr.bf16.gmra.mrb[0].mxu0 %v114
    %v155 = vpop.f32.mrb[0].mxu0
    %v156 = vadd.f32 %v100, %v155
    %v157 = vpop.f32.mrb[0].mxu0
    %v158 = vpop.f32.mrb[0].mxu0
    %v159 = vadd.f32 %v103, %v158
    %v160 = vpop.f32.mrb[0].mxu0
    %161 = vmatprep.mubr.bf16.mxu0 0
    %162 = vmatmul.mubr.bf16.gmra.mrb[0].mxu0 %v116
    %v163 = vpop.f32.mrb[0].mxu0
    %v164 = vadd.f32 %v108, %v163
    %v165 = vpop.f32.mrb[0].mxu0
    %v166 = vpop.f32.mrb[0].mxu0
    %v167 = vadd.f32 %v111, %v166
    %v168 = vpop.f32.mrb[0].mxu0
    %169 = vdwg.mxu0
    %v170 = vld [vmem:[%s3] sm:$0x1]
    %v172 = vlaneseq
    %v173 = vshrl.u32 %v172, 7
    %v174 = vsub.s32 0, %v173
    %v175 = vrot.slane %v170, %v174
    %v177 = vadd.f32 %v156, %v175
    %v178 = vadd.f32 %v159, %v175
    %v179 = vadd.f32 %v164, %v175
    %v180 = vadd.f32 %v167, %v175
    %v181 = vmax.f32 %v177, 0.0
    %v182 = vmax.f32 %v178, 0.0
    %v183 = vmax.f32 %v179, 0.0
    %v184 = vmax.f32 %v180, 0.0
    %v185 = vlaneseq
    %v186 = vshrl.u32 %v185, 7
    %v187 = vadd.s32 %v186, 8
    %vm188 = vcmp.lt.s32.totalorder %v186, 15
    %vm189 = vcmp.lt.s32.totalorder %v187, 15
    %v190 = vsel %vm188, 1, 0
    %v191 = vsel %vm189, 1, 0
    %vm192 = vcmp.eq.s32.totalorder %v190, 1
    %vm193 = vcmp.eq.s32.totalorder %v191, 1
    %v194 = vsel %vm192, %v181, 0.0
    %v195 = vsel %vm193, %v182, 0.0
    %v196 = vsel %vm192, %v183, 0.0
    %v197 = vsel %vm193, %v184, 0.0
    %vm198 = vcmask 261120
    %v199 = vsel %vm198, %v194, 0.0
    %v200 = vsel %vm198, %v195, 0.0
    %v201 = vadd.f32 %v199, %v200
    %v202 = vrot.slane %v201, 4
    %v203 = vadd.f32 %v201, %v202
    %v204 = vrot.slane %v203, 2
    %v205 = vadd.f32 %v203, %v204
    %v206 = vrot.slane %v205, 1
    %v207 = vadd.f32 %v205, %v206
    %v208 = vsel %vm198, %v196, 0.0
    %v209 = vsel %vm198, %v197, 0.0
    %v210 = vadd.f32 %v208, %v209
    %v211 = vrot.slane %v210, 4
    %v212 = vadd.f32 %v210, %v211
    %v213 = vrot.slane %v212, 2
    %v214 = vadd.f32 %v212, %v213
    %v215 = vrot.slane %v214, 1
    %v216 = vadd.f32 %v214, %v215
    %v217 = vsub.f32 %v207, %v182
    %v218 = vsub.f32 %v216, %v184
    %v219 = vmul.f32 %v217, 0.071428575
    %v220 = vmul.f32 %v218, 0.071428575
    %v221 = vsub.f32 %v207, %v181
    %v222 = vsub.f32 %v216, %v183
    %v223 = vmul.f32 %v221, 0.071428575
    %v224 = vmul.f32 %v222, 0.071428575
    %v227 = vrot.slane %v220, 7
    %vm228 = vcmask 1047559
    %v229 = vsel %vm228, %v227, %v219
    %v233 = vrot.slane %v223, 2
    %v234 = vrot.slane %v224, 1
    %v235 = vsel %vm228, %v234, %v233
    %236 = vrot.lane.b32.xlu0 %v235, 32
    %v237 = vpop.permute.xlu0 %236
    %v239 = vsel %vm198, %v229, %v237
    %v240 = vld [vmem:[%s4] sm:$0xff]
    %v241 = vld [vmem:[%s4 + $0x8] sm:$0xff]
    %v242 = vld [vmem:[%s4 + $0x10] sm:$0xff]
    %v243 = vld [vmem:[%s4 + $0x18] sm:$0xff]
    %v244 = vld [vmem:[%s4 + $0x20] sm:$0xff]
    %v245 = vld [vmem:[%s4 + $0x28] sm:$0xff]
    %v246 = vld [vmem:[%s4 + $0x30] sm:$0xff]
    %v247 = vld [vmem:[%s4 + $0x38] sm:$0xff]
    %v248 = vld [vmem:[%s5] sm:$0x1]
    %v250 = vlaneseq
    %v251 = vshrl.u32 %v250, 7
    %v252 = vsub.s32 0, %v251
    %v253 = vrot.slane %v248, %v252
    %v256 = vrot.slane %v239, 6
    %vm257 = vcmask 523264
    %v258 = vsel %vm257, %v256, 0
    %260 = vmatprep.subr.mxu0 0.0
    %261 = vmatpush1.msra.mxu0 %v240
    %262 = vmatprep.subr.mxu0 0.0
    %263 = vmatpush1.msra.mxu0 %v241
    %264 = vmatprep.subr.mxu0 0.0
    %265 = vmatpush1.msra.mxu0 %v242
    %266 = vmatprep.subr.mxu0 0.0
    %267 = vmatpush1.msra.mxu0 %v243
    %268 = vmatprep.subr.mxu0 0.0
    %269 = vmatpush1.msra.mxu0 %v244
    %270 = vmatprep.subr.mxu0 0.0
    %271 = vmatpush1.msra.mxu0 %v245
    %272 = vmatprep.subr.mxu0 0.0
    %273 = vmatpush1.msra.mxu0 %v246
    %274 = vmatprep.subr.mxu0 0.0
    %275 = vmatpush1.msra.mxu0 %v247
    %276 = vmatprep.subr.mxu0 0.0
    %277 = vmatpush1.msra.mxu0 0.0
    %278 = vmatprep.subr.mxu0 0.0
    %279 = vmatpush1.msra.mxu0 0.0
    %280 = vmatprep.subr.mxu0 0.0
    %281 = vmatpush1.msra.mxu0 0.0
    %282 = vmatprep.subr.mxu0 0.0
    %283 = vmatpush1.msra.mxu0 0.0
    %284 = vmatprep.subr.mxu0 0.0
    %285 = vmatpush1.msra.mxu0 0.0
    %286 = vmatprep.subr.mxu0 0.0
    %287 = vmatpush1.msra.mxu0 0.0
    %288 = vmatprep.subr.mxu0 0.0
    %289 = vmatpush1.msra.mxu0 0.0
    %290 = vmatprep.subr.mxu0 0.0
    %291 = vmatpush1.msra.mxu0 0.0
    %292 = vmatprep.subr.mxu0 0.0
    %293 = vmatpush1.msra.mxu0 0.0
    %294 = vmatprep.subr.mxu0 0.0
    %295 = vmatpush1.msra.mxu0 0.0
    %296 = vmatprep.subr.mxu0 0.0
    %297 = vmatpush1.msra.mxu0 0.0
    %298 = vmatprep.subr.mxu0 0.0
    %299 = vmatpush1.msra.mxu0 0.0
    %300 = vmatprep.subr.mxu0 0.0
    %301 = vmatpush1.msra.mxu0 0.0
    %302 = vmatprep.subr.mxu0 0.0
    %303 = vmatpush1.msra.mxu0 0.0
    %304 = vmatprep.subr.mxu0 0.0
    %305 = vmatpush1.msra.mxu0 0.0
    %306 = vmatprep.subr.mxu0 0.0
    %307 = vmatpush1.msra.mxu0 0.0
    %308 = vmatprep.subr.mxu0 0.0
    %309 = vmatpush1.msra.mxu0 0.0
    %310 = vmatprep.subr.mxu0 0.0
    %311 = vmatpush1.msra.mxu0 0.0
    %312 = vmatprep.subr.mxu0 0.0
    %313 = vmatpush1.msra.mxu0 0.0
    %314 = vmatprep.subr.mxu0 0.0
    %315 = vmatpush1.msra.mxu0 0.0
    %316 = vmatprep.subr.mxu0 0.0
    %317 = vmatpush1.msra.mxu0 0.0
    %318 = vmatprep.subr.mxu0 0.0
    %319 = vmatpush1.msra.mxu0 0.0
    %320 = vmatprep.subr.mxu0 0.0
    %321 = vmatpush1.msra.mxu0 0.0
    %322 = vmatprep.subr.mxu0 0.0
    %323 = vmatpush1.msra.mxu0 0.0
    %324 = vmatprep.mubr.f32.mxu0 0.0
    %325 = vmatmul.mubr.f32.gmra.mrb[0].mxu0 %v258
    %v326 = vpop.f32.mrb[0].mxu0
    %v327 = vadd.f32 %v253, %v326
    %v328 = vpop.f32.mrb[0].mxu0
    %329 = vdwg.mxu0
    %vm330 = vcmask 254976
    %331 = vst.msk [vmem:[#allocation2] sm:$0x3] %vm330, %v327
    // Predicated region
    $region26: #{tpu_custom_call.1} parent=1 // pred_check
      _
    $region27: #{tpu_custom_call.1} parent=1 // pred_check_branch
      %333 = sbr.rel (0) target = $region29
    $region28: #{tpu_custom_call.1} parent=1 // pred_region
      %s335 = ssub.s32 32, 32
      %336 = vsyncadd [#allocation3], %s335
      %s338 = sshll.u32 [#allocation2], 4
      %s339 = int_to_ptr.vmem [resolvable:$true] %s338
      %341 = dma.vmem_to_hbm [thread:$0]  %s339, 32, %s6, [#allocation3]
    $region29: #{tpu_custom_call.1} parent=1 // pred_fallthru
      _
    // Predicated region
    $region30: #{tpu_custom_call.1} parent=1 // pred_check
      _
    $region31: #{tpu_custom_call.1} parent=1 // pred_check_branch
      %343 = sbr.rel (0) target = $region33
    $region32: #{tpu_custom_call.1} parent=1 // pred_region
      %344 = dma.done [#allocation3], 32
    $region33: #{tpu_custom_call.1} parent=1 // pred_fallthru
      _
    %345 = vsyncpa [#allocation3], 1

</llo_original>
